<compile_context>
chip_gen: v5e
topology: v5e:2x2
jax: 0.10.0
libtpu: 0.0.40
codegen_flags: <defaults>
</compile_context>

<pallas_src>
import math

import jax
import jax.numpy as jnp
from jax import lax
from jax.experimental import pallas as pl
from jax.experimental.pallas import tpu as pltpu


def _round_up(x, m):
    return ((x + m - 1) // m) * m


def _pad_to(a, shape, dtype):
    """Cast `a` to dtype and zero-pad up to `shape` (no-op copy if aligned)."""
    a = a.astype(dtype)
    if a.shape == tuple(shape):
        return a
    return jnp.zeros(shape, dtype).at[tuple(slice(0, s) for s in a.shape)].set(a)


def _make_head_kernel(n_layers, compute_dtype):
    """Kernel over one row tile: chains all Linear(+GELU) layers in VMEM."""

    inv_sqrt2 = 1.0 / math.sqrt(2.0)

    def kernel(*refs):
        # refs = (x_ref, w0, b0, w1, b1, ..., w_last, b_last, o_ref)
        x_ref = refs[0]
        o_ref = refs[-1]
        h = x_ref[...]                                   # (tm, K0p) compute_dtype
        for i in range(n_layers):
            w_ref = refs[1 + 2 * i]
            b_ref = refs[2 + 2 * i]
            # MXU matmul with f32 accumulation.
            acc = jnp.dot(h, w_ref[...], preferred_element_type=jnp.float32)
            acc = acc + b_ref[...]                       # (1, N) f32 bias broadcast
            if i < n_layers - 1:
                # Exact GELU (PyTorch nn.GELU default), f32 epilogue (erf -> EUP).
                acc = 0.5 * acc * (1.0 + lax.erf(acc * inv_sqrt2))
                h = acc.astype(compute_dtype)
            else:
                o_ref[...] = acc.astype(o_ref.dtype)

    return kernel


def classifier_head_forward(x, params, in_features, *, tm=256,
                            compute_dtype=jnp.bfloat16):
    """Equivalent of Classifier_Head.forward (inference; dropout = identity).

    x: (..., in_features) f32; params: list of (W (K,N), b (N,)) f32.
    Returns (prod(leading dims), out_size) f32 logits.
    """
    out_size = params[-1][0].shape[1]
    xf = x.reshape((-1, in_features))
    M = xf.shape[0]
    n_layers = len(params)

    # Feature dims padded to multiples of 128 (lane-dense loads/stores).
    dims = [in_features] + [w.shape[1] for (w, _) in params]
    dims_p = [_round_up(d, 128) for d in dims]

    # Row tile: multiple of 16 (bf16 sublane pack), no larger than needed.
    tm = max(16, min(tm, _round_up(M, 16)))
    tm = _round_up(tm, 16)
    M_pad = _round_up(M, tm)
    grid = (M_pad // tm,)

    # Zero-pad input rows/features and parameters; padding is inert.
    xp = _pad_to(xf, (M_pad, dims_p[0]), compute_dtype)

    flat_args = [xp]
    in_specs = [pl.BlockSpec((tm, dims_p[0]), lambda i: (i, 0))]
    for li, (w, b) in enumerate(params):
        kp, np_ = dims_p[li], dims_p[li + 1]
        wp = _pad_to(w, (kp, np_), compute_dtype)
        bp = _pad_to(b.reshape(1, -1), (1, np_), jnp.float32)
        flat_args += [wp, bp]
        in_specs += [pl.BlockSpec((kp, np_), lambda i: (0, 0)),   # resident weight
                     pl.BlockSpec((1, np_), lambda i: (0, 0))]    # resident bias

    n_out_p = dims_p[-1]

    # --- cost estimate + VMEM budget (conservative, v7x-safe) ---
    flops = 2 * M_pad * sum(dims_p[i] * dims_p[i + 1] for i in range(n_layers))
    transcendentals = M_pad * sum(dims_p[1:-1])
    bytes_accessed = (sum(a.size * a.dtype.itemsize for a in flat_args)
                      + M_pad * n_out_p * 4)

    cbytes = jnp.dtype(compute_dtype).itemsize
    x_tile_b = tm * dims_p[0] * cbytes
    out_tile_b = tm * n_out_p * 4
    weights_b = sum(dims_p[i] * dims_p[i + 1] * cbytes + dims_p[i + 1] * 4
                    for i in range(n_layers))
    act_tile_b = tm * max(dims_p[1:]) * 4
    vmem_est = 2 * (x_tile_b + out_tile_b) + weights_b + 2 * act_tile_b
    vmem_limit = int(min(48 * 2**20, max(vmem_est + 4 * 2**20, 16 * 2**20)))

    out_p = pl.pallas_call(
        _make_head_kernel(n_layers, compute_dtype),
        out_shape=jax.ShapeDtypeStruct((M_pad, n_out_p), jnp.float32),
        grid_spec=pltpu.PrefetchScalarGridSpec(
            num_scalar_prefetch=0,
            grid=grid,
            in_specs=in_specs,
            out_specs=pl.BlockSpec((tm, n_out_p), lambda i: (i, 0)),
        ),
        compiler_params=pltpu.CompilerParams(
            dimension_semantics=("parallel",),
            vmem_limit_bytes=vmem_limit,
        ),
        cost_estimate=pl.CostEstimate(
            flops=flops,
            transcendentals=transcendentals,
            bytes_accessed=bytes_accessed),
    )(*flat_args)

    # Strip row padding and feature padding of the final layer.
    return out_p[:M, :out_size]


def init_params(key, in_features, clf_dims, out_size):
    """Deterministic parameter init mimicking nn.Linear's uniform init.
    Weights stored transposed (in_dim, out_dim) for x @ W."""
    params = []
    dims = [in_features] + list(clf_dims) + [out_size]
    for i in range(len(dims) - 1):
        in_dim, out_dim = dims[i], dims[i + 1]
        key, kw, kb = jax.random.split(key, 3)
        bound = 1.0 / math.sqrt(in_dim)
        w = jax.random.uniform(kw, (in_dim, out_dim), jnp.float32, -bound, bound)
        b = jax.random.uniform(kb, (out_dim,), jnp.float32, -bound, bound)
        params.append((w, b))
    return params


if __name__ == "__main__":
    # Small shapes consistent with the module's forward:
    #   batch=2, seq=8, in_features=32, clf_dims=[64, 32], out_size=4
    batch, seq_len, in_features = 2, 8, 32
    clf_dims = [64, 32]
    out_size = 4

    key = jax.random.PRNGKey(0)
    key, kx = jax.random.split(key)
    x = jax.random.normal(kx, (batch, seq_len, in_features), jnp.float32)

    params = init_params(key, in_features, clf_dims, out_size)

    out = classifier_head_forward(x, params, in_features)
    out = jax.block_until_ready(out)

    # Pure-JAX f32 reference (exact GELU, dropout = identity).
    ref = x.reshape((-1, in_features))
    for idx, (w, b) in enumerate(params):
        ref = ref @ w + b
        if idx != len(params) - 1:
            ref = 0.5 * ref * (1.0 + lax.erf(ref / math.sqrt(2.0)))

    assert out.shape == (batch * seq_len, out_size)
    # bf16 matmul inputs with f32 accumulation -> loose tolerance vs f32 ref.
    max_err = float(jnp.max(jnp.abs(out - ref)))
    assert jnp.allclose(out, ref, atol=3e-2, rtol=3e-2), max_err

    print("KERNEL_OK")
</pallas_src>

<mosaic_0001>
module attributes {stable_mosaic.version = 11 : i64} {
  func.func @kernel(%arg0: i32, %arg1: memref<16x128xbf16, #tpu.memory_space<vmem>>, %arg2: memref<128x128xbf16, #tpu.memory_space<vmem>>, %arg3: memref<1x128xf32, #tpu.memory_space<vmem>>, %arg4: memref<128x128xbf16, #tpu.memory_space<vmem>>, %arg5: memref<1x128xf32, #tpu.memory_space<vmem>>, %arg6: memref<128x128xbf16, #tpu.memory_space<vmem>>, %arg7: memref<1x128xf32, #tpu.memory_space<vmem>>, %arg8: memref<16x128xf32, #tpu.memory_space<vmem>>) attributes {dimension_semantics = [#tpu.dimension_semantics<parallel>], iteration_bounds = array<i64: 1>, scalar_prefetch = 0 : i64, scratch_operands = 0 : i64, tpu.core_type = #tpu.core_type<tc>, window_params = [{transform_indices = @transform_0, window_bounds = array<i64: 16, 128>}, {pipeline_mode = #tpu.pipeline_mode<synchronous>, transform_indices = @transform_1, window_bounds = array<i64: 128, 128>}, {pipeline_mode = #tpu.pipeline_mode<synchronous>, transform_indices = @transform_2, window_bounds = array<i64: 1, 128>}, {pipeline_mode = #tpu.pipeline_mode<synchronous>, transform_indices = @transform_3, window_bounds = array<i64: 128, 128>}, {pipeline_mode = #tpu.pipeline_mode<synchronous>, transform_indices = @transform_4, window_bounds = array<i64: 1, 128>}, {pipeline_mode = #tpu.pipeline_mode<synchronous>, transform_indices = @transform_5, window_bounds = array<i64: 128, 128>}, {pipeline_mode = #tpu.pipeline_mode<synchronous>, transform_indices = @transform_6, window_bounds = array<i64: 1, 128>}, {transform_indices = @transform_7, window_bounds = array<i64: 16, 128>}]} {
    %c0 = arith.constant 0 : index
    %c0_0 = arith.constant 0 : index
    %0 = vector.load %arg1[%c0, %c0_0] : memref<16x128xbf16, #tpu.memory_space<vmem>>, vector<16x128xbf16>
    %c0_1 = arith.constant 0 : index
    %c0_2 = arith.constant 0 : index
    %1 = vector.load %arg2[%c0_1, %c0_2] : memref<128x128xbf16, #tpu.memory_space<vmem>>, vector<128x128xbf16>
    %cst = arith.constant dense<0.000000e+00> : vector<16x128xf32>
    %2 = tpu.matmul %0, %1, %cst {dimension_numbers = #tpu.dot_dimension_numbers<[1], [0], [0], [1], [0, 0, 1, 1], [], []>} : vector<16x128xbf16>, vector<128x128xbf16>, vector<16x128xf32> -> vector<16x128xf32>
    %c0_3 = arith.constant 0 : index
    %c0_4 = arith.constant 0 : index
    %3 = vector.load %arg3[%c0_3, %c0_4] : memref<1x128xf32, #tpu.memory_space<vmem>>, vector<1x128xf32>
    %4 = vector.broadcast %3 : vector<1x128xf32> to vector<16x128xf32>
    %5 = arith.addf %2, %4 : vector<16x128xf32>
    %cst_5 = arith.constant 5.000000e-01 : f32
    %6 = vector.broadcast %cst_5 : f32 to vector<16x128xf32>
    %7 = arith.mulf %6, %5 : vector<16x128xf32>
    %cst_6 = arith.constant 0.707106769 : f32
    %8 = vector.broadcast %cst_6 : f32 to vector<16x128xf32>
    %9 = arith.mulf %5, %8 : vector<16x128xf32>
    %10 = math.erf %9 : vector<16x128xf32>
    %cst_7 = arith.constant 1.000000e+00 : f32
    %11 = vector.broadcast %cst_7 : f32 to vector<16x128xf32>
    %12 = arith.addf %11, %10 : vector<16x128xf32>
    %13 = arith.mulf %7, %12 : vector<16x128xf32>
    %14 = arith.truncf %13 : vector<16x128xf32> to vector<16x128xbf16>
    %c0_8 = arith.constant 0 : index
    %c0_9 = arith.constant 0 : index
    %15 = vector.load %arg4[%c0_8, %c0_9] : memref<128x128xbf16, #tpu.memory_space<vmem>>, vector<128x128xbf16>
    %cst_10 = arith.constant dense<0.000000e+00> : vector<16x128xf32>
    %16 = tpu.matmul %14, %15, %cst_10 {dimension_numbers = #tpu.dot_dimension_numbers<[1], [0], [0], [1], [0, 0, 1, 1], [], []>} : vector<16x128xbf16>, vector<128x128xbf16>, vector<16x128xf32> -> vector<16x128xf32>
    %c0_11 = arith.constant 0 : index
    %c0_12 = arith.constant 0 : index
    %17 = vector.load %arg5[%c0_11, %c0_12] : memref<1x128xf32, #tpu.memory_space<vmem>>, vector<1x128xf32>
    %18 = vector.broadcast %17 : vector<1x128xf32> to vector<16x128xf32>
    %19 = arith.addf %16, %18 : vector<16x128xf32>
    %cst_13 = arith.constant 5.000000e-01 : f32
    %20 = vector.broadcast %cst_13 : f32 to vector<16x128xf32>
    %21 = arith.mulf %20, %19 : vector<16x128xf32>
    %cst_14 = arith.constant 0.707106769 : f32
    %22 = vector.broadcast %cst_14 : f32 to vector<16x128xf32>
    %23 = arith.mulf %19, %22 : vector<16x128xf32>
    %24 = math.erf %23 : vector<16x128xf32>
    %cst_15 = arith.constant 1.000000e+00 : f32
    %25 = vector.broadcast %cst_15 : f32 to vector<16x128xf32>
    %26 = arith.addf %25, %24 : vector<16x128xf32>
    %27 = arith.mulf %21, %26 : vector<16x128xf32>
    %28 = arith.truncf %27 : vector<16x128xf32> to vector<16x128xbf16>
    %c0_16 = arith.constant 0 : index
    %c0_17 = arith.constant 0 : index
    %29 = vector.load %arg6[%c0_16, %c0_17] : memref<128x128xbf16, #tpu.memory_space<vmem>>, vector<128x128xbf16>
    %cst_18 = arith.constant dense<0.000000e+00> : vector<16x128xf32>
    %30 = tpu.matmul %28, %29, %cst_18 {dimension_numbers = #tpu.dot_dimension_numbers<[1], [0], [0], [1], [0, 0, 1, 1], [], []>} : vector<16x128xbf16>, vector<128x128xbf16>, vector<16x128xf32> -> vector<16x128xf32>
    %c0_19 = arith.constant 0 : index
    %c0_20 = arith.constant 0 : index
    %31 = vector.load %arg7[%c0_19, %c0_20] : memref<1x128xf32, #tpu.memory_space<vmem>>, vector<1x128xf32>
    %32 = vector.broadcast %31 : vector<1x128xf32> to vector<16x128xf32>
    %33 = arith.addf %30, %32 : vector<16x128xf32>
    %c0_21 = arith.constant 0 : index
    %c0_22 = arith.constant 0 : index
    %34 = vector.load %arg8[%c0_21, %c0_22] : memref<16x128xf32, #tpu.memory_space<vmem>>, vector<16x128xf32>
    tpu.vector_store %arg8[%c0_21, %c0_22], %33 {strides = array<i32>} : memref<16x128xf32, #tpu.memory_space<vmem>>, vector<16x128xf32>,
    return
  }
  func.func @transform_0(%arg0: i32) -> (i32, i32) {
    %c0_i32 = arith.constant 0 : i32
    %c0_i32_0 = arith.constant 0 : i32
    return %arg0, %c0_i32 : i32, i32
  }
  func.func @transform_1(%arg0: i32) -> (i32, i32) {
    %c0_i32 = arith.constant 0 : i32
    %c0_i32_0 = arith.constant 0 : i32
    %c0_i32_1 = arith.constant 0 : i32
    return %c0_i32, %c0_i32_0 : i32, i32
  }
  func.func @transform_2(%arg0: i32) -> (i32, i32) {
    %c0_i32 = arith.constant 0 : i32
    %c0_i32_0 = arith.constant 0 : i32
    %c0_i32_1 = arith.constant 0 : i32
    return %c0_i32, %c0_i32_0 : i32, i32
  }
  func.func @transform_3(%arg0: i32) -> (i32, i32) {
    %c0_i32 = arith.constant 0 : i32
    %c0_i32_0 = arith.constant 0 : i32
    %c0_i32_1 = arith.constant 0 : i32
    return %c0_i32, %c0_i32_0 : i32, i32
  }
  func.func @transform_4(%arg0: i32) -> (i32, i32) {
    %c0_i32 = arith.constant 0 : i32
    %c0_i32_0 = arith.constant 0 : i32
    %c0_i32_1 = arith.constant 0 : i32
    return %c0_i32, %c0_i32_0 : i32, i32
  }
  func.func @transform_5(%arg0: i32) -> (i32, i32) {
    %c0_i32 = arith.constant 0 : i32
    %c0_i32_0 = arith.constant 0 : i32
    %c0_i32_1 = arith.constant 0 : i32
    return %c0_i32, %c0_i32_0 : i32, i32
  }
  func.func @transform_6(%arg0: i32) -> (i32, i32) {
    %c0_i32 = arith.constant 0 : i32
    %c0_i32_0 = arith.constant 0 : i32
    %c0_i32_1 = arith.constant 0 : i32
    return %c0_i32, %c0_i32_0 : i32, i32
  }
  func.func @transform_7(%arg0: i32) -> (i32, i32) {
    %c0_i32 = arith.constant 0 : i32
    %c0_i32_0 = arith.constant 0 : i32
    return %arg0, %c0_i32 : i32, i32
  }
}

</mosaic_0001>

<llo_original>
// kernel: tpu_custom_call.1
$region0: #{tpu_custom_call.1}
  #allocation0 [shape = 'u32[]', space=smem, size = 0x4, offset = 0x4, fixed_abs, tag = 'smem constant byte address 0x4 - core index']
  #allocation1 [shape = 'u32[72,128]{1,0:T(1,128)}', space=vmem, size = 0x9000, scoped, tag = 'internal scratch']
  %s0 = inlined_call_operand.hbm [shape: bf16[16,128], index: 0, kind: input, shape index: {}]
  %s1 = inlined_call_operand.hbm [shape: bf16[128,128], index: 1, kind: input, shape index: {}]
  %s2 = inlined_call_operand.vmem [shape: f32[1,128], index: 2, kind: input, shape index: {}]
  %s3 = inlined_call_operand.hbm [shape: bf16[128,128], index: 3, kind: input, shape index: {}]
  %s4 = inlined_call_operand.vmem [shape: f32[1,128], index: 4, kind: input, shape index: {}]
  %s5 = inlined_call_operand.hbm [shape: bf16[128,128], index: 5, kind: input, shape index: {}]
  %s6 = inlined_call_operand.vmem [shape: f32[1,128], index: 6, kind: input, shape index: {}]
  %s7 = inlined_call_operand.hbm [shape: f32[16,128], index: 7, kind: output, shape index: {}]
  %s8 = sld [smem:[#allocation0]]
  $region54: #{tpu_custom_call.1} parent=0
    _
  %s10 = ssub.s32 1, %s8
  %s11 = scalar_select 0, %s10, %s8
  $region1: #{tpu_custom_call.1} parent=0
    #allocation2 [shape = 'u8[4096]{0}', space=vmem, size = 0x1000, scoped, tag = 'input window, operand 0, single buffered']
    #allocation3 [shape = 's32[1]{0}', space=sflag, size = 0x4, scoped, tag = 'scoped memory for tpu_custom_call.1']
    #allocation4 [shape = 's32[1]{0}', space=sflag, size = 0x4, scoped, tag = 'scoped memory for tpu_custom_call.1']
    #allocation5 [shape = 'u8[32768]{0}', space=vmem, size = 0x8000, scoped, tag = 'input window, operand 1, single buffered']
    #allocation6 [shape = 's32[1]{0}', space=sflag, size = 0x4, scoped, tag = 'scoped memory for tpu_custom_call.1']
    #allocation7 [shape = 'u8[32768]{0}', space=vmem, size = 0x8000, scoped, tag = 'input window, operand 3, single buffered']
    #allocation8 [shape = 'u8[32768]{0}', space=vmem, size = 0x8000, scoped, tag = 'input window, operand 5, single buffered']
    #allocation9 [shape = 's32[1]{0}', space=sflag, size = 0x4, scoped, tag = 'scoped memory for tpu_custom_call.1']
    #allocation10 [shape = 'u8[8192]{0}', space=vmem, size = 0x2000, scoped, tag = 'output window, operand 0, single buffered']
    %12 = vsyncpa [#allocation3], 0
    %13 = vsyncpa [#allocation6], 0
    %14 = vsyncpa [#allocation9], 0
    %15 = vsyncpa [#allocation4], 0
    // Predicated region
    $region2: #{tpu_custom_call.1} parent=1 // pred_check
      _
    $region3: #{tpu_custom_call.1} parent=1 // pred_check_branch
      %17 = sbr.rel (0) target = $region5
    $region4: #{tpu_custom_call.1} parent=1 // pred_region
      %19 = vsyncadd [#allocation3], 0
      %s20 = sshll.u32 %s0, 4
      %s21 = int_to_ptr.hbm [resolvable:$true] %s20
      %s22 = sshll.u32 [#allocation2], 4
      %s23 = int_to_ptr.vmem [resolvable:$true] %s22
      %28 = dma.hbm_to_vmem [thread:$0]  %s21, 128, %s23, [#allocation3], 64, 64, 4
    $region5: #{tpu_custom_call.1} parent=1 // pred_fallthru
      _
    // Predicated region
    $region6: #{tpu_custom_call.1} parent=1 // pred_check
      _
    $region7: #{tpu_custom_call.1} parent=1 // pred_check_branch
      %30 = sbr.rel (0) target = $region9
    $region8: #{tpu_custom_call.1} parent=1 // pred_region
      %32 = vsyncadd [#allocation6], 0
      %s33 = sshll.u32 %s1, 4
      %s34 = int_to_ptr.hbm [resolvable:$true] %s33
      %s35 = sshll.u32 [#allocation5], 4
      %s36 = int_to_ptr.vmem [resolvable:$true] %s35
      %41 = dma.hbm_to_vmem [thread:$0]  %s34, 1024, %s36, [#allocation6], 64, 64, 4
    $region9: #{tpu_custom_call.1} parent=1 // pred_fallthru
      _
    // Predicated region
    $region10: #{tpu_custom_call.1} parent=1 // pred_check
      _
    $region11: #{tpu_custom_call.1} parent=1 // pred_check_branch
      %43 = sbr.rel (0) target = $region13
    $region12: #{tpu_custom_call.1} parent=1 // pred_region
      _
    $region13: #{tpu_custom_call.1} parent=1 // pred_fallthru
      _
    // Predicated region
    $region14: #{tpu_custom_call.1} parent=1 // pred_check
      _
    $region15: #{tpu_custom_call.1} parent=1 // pred_check_branch
      %45 = sbr.rel (0) target = $region17
    $region16: #{tpu_custom_call.1} parent=1 // pred_region
      %47 = vsyncadd [#allocation6], 0
      %s48 = sshll.u32 %s3, 4
      %s49 = int_to_ptr.hbm [resolvable:$true] %s48
      %s50 = sshll.u32 [#allocation7], 4
      %s51 = int_to_ptr.vmem [resolvable:$true] %s50
      %56 = dma.hbm_to_vmem [thread:$0]  %s49, 1024, %s51, [#allocation6], 64, 64, 4
    $region17: #{tpu_custom_call.1} parent=1 // pred_fallthru
      _
    // Predicated region
    $region18: #{tpu_custom_call.1} parent=1 // pred_check
      _
    $region19: #{tpu_custom_call.1} parent=1 // pred_check_branch
      %58 = sbr.rel (0) target = $region21
    $region20: #{tpu_custom_call.1} parent=1 // pred_region
      _
    $region21: #{tpu_custom_call.1} parent=1 // pred_fallthru
      _
    // Predicated region
    $region22: #{tpu_custom_call.1} parent=1 // pred_check
      _
    $region23: #{tpu_custom_call.1} parent=1 // pred_check_branch
      %60 = sbr.rel (0) target = $region25
    $region24: #{tpu_custom_call.1} parent=1 // pred_region
      %62 = vsyncadd [#allocation9], 0
      %s63 = sshll.u32 %s5, 4
      %s64 = int_to_ptr.hbm [resolvable:$true] %s63
      %s65 = sshll.u32 [#allocation8], 4
      %s66 = int_to_ptr.vmem [resolvable:$true] %s65
      %71 = dma.hbm_to_vmem [thread:$0]  %s64, 1024, %s66, [#allocation9], 64, 64, 4
    $region25: #{tpu_custom_call.1} parent=1 // pred_fallthru
      _
    // Predicated region
    $region26: #{tpu_custom_call.1} parent=1 // pred_check
      _
    $region27: #{tpu_custom_call.1} parent=1 // pred_check_branch
      %73 = sbr.rel (0) target = $region29
    $region28: #{tpu_custom_call.1} parent=1 // pred_region
      _
    $region29: #{tpu_custom_call.1} parent=1 // pred_fallthru
      _
    // Predicated region
    $region30: #{tpu_custom_call.1} parent=1 // pred_check
      _
    $region31: #{tpu_custom_call.1} parent=1 // pred_check_branch
      %75 = sbr.rel (0) target = $region33
    $region32: #{tpu_custom_call.1} parent=1 // pred_region
      %77 = dma.done [#allocation3], 128
    $region33: #{tpu_custom_call.1} parent=1 // pred_fallthru
      _
    // Predicated region
    $region34: #{tpu_custom_call.1} parent=1 // pred_check
      _
    $region35: #{tpu_custom_call.1} parent=1 // pred_check_branch
      %79 = sbr.rel (0) target = $region37
    $region36: #{tpu_custom_call.1} parent=1 // pred_region
      %81 = dma.done [#allocation6], 1024
    $region37: #{tpu_custom_call.1} parent=1 // pred_fallthru
      _
    // Predicated region
    $region38: #{tpu_custom_call.1} parent=1 // pred_check
      _
    $region39: #{tpu_custom_call.1} parent=1 // pred_check_branch
      %83 = sbr.rel (0) target = $region41
    $region40: #{tpu_custom_call.1} parent=1 // pred_region
      %85 = dma.done [#allocation6], 1024
    $region41: #{tpu_custom_call.1} parent=1 // pred_fallthru
      _
    // Predicated region
    $region42: #{tpu_custom_call.1} parent=1 // pred_check
      _
    $region43: #{tpu_custom_call.1} parent=1 // pred_check_branch
      %87 = sbr.rel (0) target = $region45
    $region44: #{tpu_custom_call.1} parent=1 // pred_region
      %89 = dma.done [#allocation9], 1024
    $region45: #{tpu_custom_call.1} parent=1 // pred_fallthru
      _
    %v90 = vld [vmem:[#allocation2] sm:$0xf]
    %v91 = vld [vmem:[#allocation2 + $0x4] sm:$0xf]
    %v92 = vld [vmem:[#allocation5] sm:$0xf]
    %v93 = vld [vmem:[#allocation5 + $0x4] sm:$0xf]
    %v94 = vld [vmem:[#allocation5 + $0x8] sm:$0xf]
    %v95 = vld [vmem:[#allocation5 + $0xc] sm:$0xf]
    %v96 = vld [vmem:[#allocation5 + $0x10] sm:$0xf]
    %v97 = vld [vmem:[#allocation5 + $0x14] sm:$0xf]
    %v98 = vld [vmem:[#allocation5 + $0x18] sm:$0xf]
    %v99 = vld [vmem:[#allocation5 + $0x1c] sm:$0xf]
    %v100 = vld [vmem:[#allocation5 + $0x20] sm:$0xf]
    %v101 = vld [vmem:[#allocation5 + $0x24] sm:$0xf]
    %v102 = vld [vmem:[#allocation5 + $0x28] sm:$0xf]
    %v103 = vld [vmem:[#allocation5 + $0x2c] sm:$0xf]
    %v104 = vld [vmem:[#allocation5 + $0x30] sm:$0xf]
    %v105 = vld [vmem:[#allocation5 + $0x34] sm:$0xf]
    %v106 = vld [vmem:[#allocation5 + $0x38] sm:$0xf]
    %v107 = vld [vmem:[#allocation5 + $0x3c] sm:$0xf]
    %v108 = vld [vmem:[%s2] sm:$0x1]
    %v110 = vperm.slane %v108, 0
    %v114 = vunpack.c.l.b16 %v90
    %v115 = vunpack.c.l.b16 %v91
    %v116 = vpack.c.b16 %v115, %v114
    %v134 = vunpack.c.l.b16 %v92
    %v135 = vunpack.c.l.b16 %v93
    %v136 = vunpack.c.l.b16 %v94
    %v137 = vunpack.c.l.b16 %v95
    %v138 = vunpack.c.l.b16 %v96
    %v139 = vunpack.c.l.b16 %v97
    %v140 = vunpack.c.l.b16 %v98
    %v141 = vunpack.c.l.b16 %v99
    %v142 = vunpack.c.l.b16 %v100
    %v143 = vunpack.c.l.b16 %v101
    %v144 = vunpack.c.l.b16 %v102
    %v145 = vunpack.c.l.b16 %v103
    %v146 = vunpack.c.l.b16 %v104
    %v147 = vunpack.c.l.b16 %v105
    %v148 = vunpack.c.l.b16 %v106
    %v149 = vunpack.c.l.b16 %v107
    %v150 = vpack.c.b16 %v135, %v134
    %v151 = vpack.c.b16 %v137, %v136
    %v152 = vpack.c.b16 %v139, %v138
    %v153 = vpack.c.b16 %v141, %v140
    %v154 = vpack.c.b16 %v143, %v142
    %v155 = vpack.c.b16 %v145, %v144
    %v156 = vpack.c.b16 %v147, %v146
    %v157 = vpack.c.b16 %v149, %v148
    %166 = vmatpush.bf16.msra.mxu0 %v157
    %167 = vmatpush.bf16.msra.mxu0 %v156
    %168 = vmatpush.bf16.msra.mxu0 %v155
    %169 = vmatpush.bf16.msra.mxu0 %v154
    %170 = vmatpush.bf16.msra.mxu0 %v153
    %171 = vmatpush.bf16.msra.mxu0 %v152
    %172 = vmatpush.bf16.msra.mxu0 %v151
    %173 = vmatpush.bf16.msra.mxu0 %v150
    %174 = vmatmul.bf16.gmra.mxu0 %v116
    %v175 = vpop.f32.mrf.mxu0
    %v176 = vadd.f32 %v110, %v175
    %v177 = vpop.f32.mrf.mxu0
    %v178 = vadd.f32 %v110, %v177
    %179 = vdwg.mxu0
    %v180 = vmul.f32 %v176, 0.5
    %v181 = vmul.f32 %v178, 0.5
    %v182 = vmul.f32 %v176, 0.70710677
    %v183 = vmul.f32 %v178, 0.70710677
    %v184 = vmul.f32 %v182, %v182
    %v185 = vmin.f32 16.0, %v184
    %v186 = vmul.f32 %v185, 2.1237322e-06
    %v187 = vadd.f32 %v186, 0.00028619796
    %v188 = vmul.f32 %v185, %v187
    %v189 = vadd.f32 %v188, 0.0036580483
    %v190 = vmul.f32 %v185, %v189
    %v191 = vadd.f32 %v190, 0.05243302
    %v192 = vmul.f32 %v185, %v191
    %v193 = vadd.f32 %v192, 0.18741608
    %v194 = vmul.f32 %v185, %v193
    %v195 = vadd.f32 %v194, 1.1283791
    %v196 = vmul.f32 %v182, %v195
    %v197 = vmul.f32 %v185, 3.8918573e-05
    %v198 = vadd.f32 %v197, 0.001143296
    %v199 = vmul.f32 %v185, %v198
    %v200 = vadd.f32 %v199, 0.014752088
    %v201 = vmul.f32 %v185, %v200
    %v202 = vadd.f32 %v201, 0.112945676
    %v203 = vmul.f32 %v185, %v202
    %v204 = vadd.f32 %v203, 0.4994258
    %v205 = vmul.f32 %v185, %v204
    %v206 = vadd.f32 %v205, 1.0
    %v207 = vrcp.pop %v206
    %v208 = vmul.f32 %v206, %v207
    %v209 = vsub.f32 1.0, %v208
    %v210 = vmul.f32 %v207, %v209
    %v211 = vadd.f32 %v207, %v210
    %vm212 = vweird.f32 %v206
    %vm213 = vweird.f32 %v207
    %vm214 = vmor %vm212, %vm213
    %v215 = vsel %vm214, %v207, %v211
    %v216 = vand.u32 2147483647, %v206
    %vm217 = vcmp.eq.f32.partialorder %v216, 8.507059e+37
    %v218 = vand.u32 %v206, 2147483648
    %v219 = vor.u32 1.1754944e-38, %v218
    %v220 = vsel %vm217, %v219, %v215
    %v221 = vmul.f32 %v196, %v220
    %v222 = vmin.f32 %v221, 1.0
    %v223 = vmax.f32 %v222, -1.0
    %v224 = vmul.f32 %v183, %v183
    %v225 = vmin.f32 16.0, %v224
    %v226 = vmul.f32 %v225, 2.1237322e-06
    %v227 = vadd.f32 %v226, 0.00028619796
    %v228 = vmul.f32 %v225, %v227
    %v229 = vadd.f32 %v228, 0.0036580483
    %v230 = vmul.f32 %v225, %v229
    %v231 = vadd.f32 %v230, 0.05243302
    %v232 = vmul.f32 %v225, %v231
    %v233 = vadd.f32 %v232, 0.18741608
    %v234 = vmul.f32 %v225, %v233
    %v235 = vadd.f32 %v234, 1.1283791
    %v236 = vmul.f32 %v183, %v235
    %v237 = vmul.f32 %v225, 3.8918573e-05
    %v238 = vadd.f32 %v237, 0.001143296
    %v239 = vmul.f32 %v225, %v238
    %v240 = vadd.f32 %v239, 0.014752088
    %v241 = vmul.f32 %v225, %v240
    %v242 = vadd.f32 %v241, 0.112945676
    %v243 = vmul.f32 %v225, %v242
    %v244 = vadd.f32 %v243, 0.4994258
    %v245 = vmul.f32 %v225, %v244
    %v246 = vadd.f32 %v245, 1.0
    %v247 = vrcp.pop %v246
    %v248 = vmul.f32 %v246, %v247
    %v249 = vsub.f32 1.0, %v248
    %v250 = vmul.f32 %v247, %v249
    %v251 = vadd.f32 %v247, %v250
    %vm252 = vweird.f32 %v246
    %vm253 = vweird.f32 %v247
    %vm254 = vmor %vm252, %vm253
    %v255 = vsel %vm254, %v247, %v251
    %v256 = vand.u32 2147483647, %v246
    %vm257 = vcmp.eq.f32.partialorder %v256, 8.507059e+37
    %v258 = vand.u32 %v246, 2147483648
    %v259 = vor.u32 1.1754944e-38, %v258
    %v260 = vsel %vm257, %v259, %v255
    %v261 = vmul.f32 %v236, %v260
    %v262 = vmin.f32 %v261, 1.0
    %v263 = vmax.f32 %v262, -1.0
    %v264 = vadd.f32 %v223, 1.0
    %v265 = vadd.f32 %v263, 1.0
    %v266 = vmul.f32 %v180, %v264
    %v267 = vmul.f32 %v181, %v265
    %v268 = vpack.c.bf16 %v267, %v266
    %v269 = vld [vmem:[#allocation7] sm:$0xf]
    %v270 = vld [vmem:[#allocation7 + $0x4] sm:$0xf]
    %v271 = vld [vmem:[#allocation7 + $0x8] sm:$0xf]
    %v272 = vld [vmem:[#allocation7 + $0xc] sm:$0xf]
    %v273 = vld [vmem:[#allocation7 + $0x10] sm:$0xf]
    %v274 = vld [vmem:[#allocation7 + $0x14] sm:$0xf]
    %v275 = vld [vmem:[#allocation7 + $0x18] sm:$0xf]
    %v276 = vld [vmem:[#allocation7 + $0x1c] sm:$0xf]
    %v277 = vld [vmem:[#allocation7 + $0x20] sm:$0xf]
    %v278 = vld [vmem:[#allocation7 + $0x24] sm:$0xf]
    %v279 = vld [vmem:[#allocation7 + $0x28] sm:$0xf]
    %v280 = vld [vmem:[#allocation7 + $0x2c] sm:$0xf]
    %v281 = vld [vmem:[#allocation7 + $0x30] sm:$0xf]
    %v282 = vld [vmem:[#allocation7 + $0x34] sm:$0xf]
    %v283 = vld [vmem:[#allocation7 + $0x38] sm:$0xf]
    %v284 = vld [vmem:[#allocation7 + $0x3c] sm:$0xf]
    %v285 = vld [vmem:[%s4] sm:$0x1]
    %v287 = vperm.slane %v285, 0
    %v305 = vunpack.c.l.b16 %v269
    %v306 = vunpack.c.l.b16 %v270
    %v307 = vunpack.c.l.b16 %v271
    %v308 = vunpack.c.l.b16 %v272
    %v309 = vunpack.c.l.b16 %v273
    %v310 = vunpack.c.l.b16 %v274
    %v311 = vunpack.c.l.b16 %v275
    %v312 = vunpack.c.l.b16 %v276
    %v313 = vunpack.c.l.b16 %v277
    %v314 = vunpack.c.l.b16 %v278
    %v315 = vunpack.c.l.b16 %v279
    %v316 = vunpack.c.l.b16 %v280
    %v317 = vunpack.c.l.b16 %v281
    %v318 = vunpack.c.l.b16 %v282
    %v319 = vunpack.c.l.b16 %v283
    %v320 = vunpack.c.l.b16 %v284
    %v321 = vpack.c.b16 %v306, %v305
    %v322 = vpack.c.b16 %v308, %v307
    %v323 = vpack.c.b16 %v310, %v309
    %v324 = vpack.c.b16 %v312, %v311
    %v325 = vpack.c.b16 %v314, %v313
    %v326 = vpack.c.b16 %v316, %v315
    %v327 = vpack.c.b16 %v318, %v317
    %v328 = vpack.c.b16 %v320, %v319
    %337 = vmatpush.bf16.msra.mxu0 %v328
    %338 = vmatpush.bf16.msra.mxu0 %v327
    %339 = vmatpush.bf16.msra.mxu0 %v326
    %340 = vmatpush.bf16.msra.mxu0 %v325
    %341 = vmatpush.bf16.msra.mxu0 %v324
    %342 = vmatpush.bf16.msra.mxu0 %v323
    %343 = vmatpush.bf16.msra.mxu0 %v322
    %344 = vmatpush.bf16.msra.mxu0 %v321
    %345 = vmatmul.bf16.gmra.mxu0 %v268
    %v346 = vpop.f32.mrf.mxu0
    %v347 = vadd.f32 %v287, %v346
    %v348 = vpop.f32.mrf.mxu0
    %v349 = vadd.f32 %v287, %v348
    %350 = vdwg.mxu0
    %v351 = vmul.f32 %v347, 0.5
    %v352 = vmul.f32 %v349, 0.5
    %v353 = vmul.f32 %v347, 0.70710677
    %v354 = vmul.f32 %v349, 0.70710677
    %v355 = vmul.f32 %v353, %v353
    %v356 = vmin.f32 16.0, %v355
    %v357 = vmul.f32 %v356, 2.1237322e-06
    %v358 = vadd.f32 %v357, 0.00028619796
    %v359 = vmul.f32 %v356, %v358
    %v360 = vadd.f32 %v359, 0.0036580483
    %v361 = vmul.f32 %v356, %v360
    %v362 = vadd.f32 %v361, 0.05243302
    %v363 = vmul.f32 %v356, %v362
    %v364 = vadd.f32 %v363, 0.18741608
    %v365 = vmul.f32 %v356, %v364
    %v366 = vadd.f32 %v365, 1.1283791
    %v367 = vmul.f32 %v353, %v366
    %v368 = vmul.f32 %v356, 3.8918573e-05
    %v369 = vadd.f32 %v368, 0.001143296
    %v370 = vmul.f32 %v356, %v369
    %v371 = vadd.f32 %v370, 0.014752088
    %v372 = vmul.f32 %v356, %v371
    %v373 = vadd.f32 %v372, 0.112945676
    %v374 = vmul.f32 %v356, %v373
    %v375 = vadd.f32 %v374, 0.4994258
    %v376 = vmul.f32 %v356, %v375
    %v377 = vadd.f32 %v376, 1.0
    %v378 = vrcp.pop %v377
    %v379 = vmul.f32 %v377, %v378
    %v380 = vsub.f32 1.0, %v379
    %v381 = vmul.f32 %v378, %v380
    %v382 = vadd.f32 %v378, %v381
    %vm383 = vweird.f32 %v377
    %vm384 = vweird.f32 %v378
    %vm385 = vmor %vm383, %vm384
    %v386 = vsel %vm385, %v378, %v382
    %v387 = vand.u32 2147483647, %v377
    %vm388 = vcmp.eq.f32.partialorder %v387, 8.507059e+37
    %v389 = vand.u32 %v377, 2147483648
    %v390 = vor.u32 1.1754944e-38, %v389
    %v391 = vsel %vm388, %v390, %v386
    %v392 = vmul.f32 %v367, %v391
    %v393 = vmin.f32 %v392, 1.0
    %v394 = vmax.f32 %v393, -1.0
    %v395 = vmul.f32 %v354, %v354
    %v396 = vmin.f32 16.0, %v395
    %v397 = vmul.f32 %v396, 2.1237322e-06
    %v398 = vadd.f32 %v397, 0.00028619796
    %v399 = vmul.f32 %v396, %v398
    %v400 = vadd.f32 %v399, 0.0036580483
    %v401 = vmul.f32 %v396, %v400
    %v402 = vadd.f32 %v401, 0.05243302
    %v403 = vmul.f32 %v396, %v402
    %v404 = vadd.f32 %v403, 0.18741608
    %v405 = vmul.f32 %v396, %v404
    %v406 = vadd.f32 %v405, 1.1283791
    %v407 = vmul.f32 %v354, %v406
    %v408 = vmul.f32 %v396, 3.8918573e-05
    %v409 = vadd.f32 %v408, 0.001143296
    %v410 = vmul.f32 %v396, %v409
    %v411 = vadd.f32 %v410, 0.014752088
    %v412 = vmul.f32 %v396, %v411
    %v413 = vadd.f32 %v412, 0.112945676
    %v414 = vmul.f32 %v396, %v413
    %v415 = vadd.f32 %v414, 0.4994258
    %v416 = vmul.f32 %v396, %v415
    %v417 = vadd.f32 %v416, 1.0
    %v418 = vrcp.pop %v417
    %v419 = vmul.f32 %v417, %v418
    %v420 = vsub.f32 1.0, %v419
    %v421 = vmul.f32 %v418, %v420
    %v422 = vadd.f32 %v418, %v421
    %vm423 = vweird.f32 %v417
    %vm424 = vweird.f32 %v418
    %vm425 = vmor %vm423, %vm424
    %v426 = vsel %vm425, %v418, %v422
    %v427 = vand.u32 2147483647, %v417
    %vm428 = vcmp.eq.f32.partialorder %v427, 8.507059e+37
    %v429 = vand.u32 %v417, 2147483648
    %v430 = vor.u32 1.1754944e-38, %v429
    %v431 = vsel %vm428, %v430, %v426
    %v432 = vmul.f32 %v407, %v431
    %v433 = vmin.f32 %v432, 1.0
    %v434 = vmax.f32 %v433, -1.0
    %v435 = vadd.f32 %v394, 1.0
    %v436 = vadd.f32 %v434, 1.0
    %v437 = vmul.f32 %v351, %v435
    %v438 = vmul.f32 %v352, %v436
    %v439 = vpack.c.bf16 %v438, %v437
    %v440 = vld [vmem:[#allocation8] sm:$0xf]
    %v441 = vld [vmem:[#allocation8 + $0x4] sm:$0xf]
    %v442 = vld [vmem:[#allocation8 + $0x8] sm:$0xf]
    %v443 = vld [vmem:[#allocation8 + $0xc] sm:$0xf]
    %v444 = vld [vmem:[#allocation8 + $0x10] sm:$0xf]
    %v445 = vld [vmem:[#allocation8 + $0x14] sm:$0xf]
    %v446 = vld [vmem:[#allocation8 + $0x18] sm:$0xf]
    %v447 = vld [vmem:[#allocation8 + $0x1c] sm:$0xf]
    %v448 = vld [vmem:[#allocation8 + $0x20] sm:$0xf]
    %v449 = vld [vmem:[#allocation8 + $0x24] sm:$0xf]
    %v450 = vld [vmem:[#allocation8 + $0x28] sm:$0xf]
    %v451 = vld [vmem:[#allocation8 + $0x2c] sm:$0xf]
    %v452 = vld [vmem:[#allocation8 + $0x30] sm:$0xf]
    %v453 = vld [vmem:[#allocation8 + $0x34] sm:$0xf]
    %v454 = vld [vmem:[#allocation8 + $0x38] sm:$0xf]
    %v455 = vld [vmem:[#allocation8 + $0x3c] sm:$0xf]
    %v456 = vld [vmem:[%s6] sm:$0x1]
    %v458 = vperm.slane %v456, 0
    %v476 = vunpack.c.l.b16 %v440
    %v477 = vunpack.c.l.b16 %v441
    %v478 = vunpack.c.l.b16 %v442
    %v479 = vunpack.c.l.b16 %v443
    %v480 = vunpack.c.l.b16 %v444
    %v481 = vunpack.c.l.b16 %v445
    %v482 = vunpack.c.l.b16 %v446
    %v483 = vunpack.c.l.b16 %v447
    %v484 = vunpack.c.l.b16 %v448
    %v485 = vunpack.c.l.b16 %v449
    %v486 = vunpack.c.l.b16 %v450
    %v487 = vunpack.c.l.b16 %v451
    %v488 = vunpack.c.l.b16 %v452
    %v489 = vunpack.c.l.b16 %v453
    %v490 = vunpack.c.l.b16 %v454
    %v491 = vunpack.c.l.b16 %v455
    %v492 = vpack.c.b16 %v477, %v476
    %v493 = vpack.c.b16 %v479, %v478
    %v494 = vpack.c.b16 %v481, %v480
    %v495 = vpack.c.b16 %v483, %v482
    %v496 = vpack.c.b16 %v485, %v484
    %v497 = vpack.c.b16 %v487, %v486
    %v498 = vpack.c.b16 %v489, %v488
    %v499 = vpack.c.b16 %v491, %v490
    %508 = vmatpush.bf16.msra.mxu0 %v499
    %509 = vmatpush.bf16.msra.mxu0 %v498
    %510 = vmatpush.bf16.msra.mxu0 %v497
    %511 = vmatpush.bf16.msra.mxu0 %v496
    %512 = vmatpush.bf16.msra.mxu0 %v495
    %513 = vmatpush.bf16.msra.mxu0 %v494
    %514 = vmatpush.bf16.msra.mxu0 %v493
    %515 = vmatpush.bf16.msra.mxu0 %v492
    %516 = vmatmul.bf16.gmra.mxu0 %v439
    %v517 = vpop.f32.mrf.mxu0
    %v518 = vadd.f32 %v458, %v517
    %v519 = vpop.f32.mrf.mxu0
    %v520 = vadd.f32 %v458, %v519
    %521 = vdwg.mxu0
    %522 = vst [vmem:[#allocation10] sm:$0xff] %v518
    %523 = vst [vmem:[#allocation10 + $0x8] sm:$0xff] %v520
    // Predicated region
    $region46: #{tpu_custom_call.1} parent=1 // pred_check
      _
    $region47: #{tpu_custom_call.1} parent=1 // pred_check_branch
      %525 = sbr.rel (0) target = $region49
    $region48: #{tpu_custom_call.1} parent=1 // pred_region
      %527 = vsyncadd [#allocation4], 0
      %s528 = sshll.u32 [#allocation10], 4
      %s529 = int_to_ptr.vmem [resolvable:$true] %s528
      %s530 = sshll.u32 %s7, 4
      %s531 = int_to_ptr.hbm [resolvable:$true] %s530
      %536 = dma.vmem_to_hbm [thread:$0]  %s529, 256, %s531, [#allocation4], 128, 128, 8
    $region49: #{tpu_custom_call.1} parent=1 // pred_fallthru
      _
    // Predicated region
    $region50: #{tpu_custom_call.1} parent=1 // pred_check
      _
    $region51: #{tpu_custom_call.1} parent=1 // pred_check_branch
      %538 = sbr.rel (0) target = $region53
    $region52: #{tpu_custom_call.1} parent=1 // pred_region
      %540 = dma.done [#allocation4], 256
    $region53: #{tpu_custom_call.1} parent=1 // pred_fallthru
      _
    %541 = vsyncpa [#allocation3], 1
    %542 = vsyncpa [#allocation6], 1
    %543 = vsyncpa [#allocation9], 1
    %544 = vsyncpa [#allocation4], 1

</llo_original>
